<compile_context>
chip_gen: v5e
topology: v5e:2x2
jax: 0.10.0
libtpu: 0.0.40
codegen_flags: <defaults>
</compile_context>

<pallas_src>
import jax
import jax.numpy as jnp
from jax.experimental import pallas as pl
from jax.experimental.pallas import tpu as pltpu

LANE = 128
TB = 16  # batch tile: sublane-dense for bf16 operands (16 rows/vreg), mult. of 8 for f32 out


def _round_up(n, m):
    return ((n + m - 1) // m) * m


def _pad_dim(x, axis, target):
    pad = target - x.shape[axis]
    if pad == 0:
        return x
    widths = [(0, 0)] * x.ndim
    widths[axis] = (0, pad)
    return jnp.pad(x, widths)


# -------------------- Pallas kernel (fused affine forward) ------------------
def vqa_kernel(pooled_ref, q_ref, a_ref, bq_ref, c_ref, out_ref):
    # out = pooled @ A + q @ Bq + c
    # A / Bq already contain the patch-embed, mean-scale, tokenizer and
    # classifier weights (pre-composed); c contains all biases.
    out = (jnp.dot(pooled_ref[...], a_ref[...],
                   preferred_element_type=jnp.float32)
           + jnp.dot(q_ref[...], bq_ref[...],
                     preferred_element_type=jnp.float32)
           + c_ref[...])
    out_ref[...] = out.astype(out_ref.dtype)


# -------------------- parameter prep (one-time) ------------------------------
def prepare_params(params):
    """Pre-compose the fully affine chain, split the classifier weight along
    the concat boundary, pad lane dims to multiples of 128, and cast matmul
    operands to bf16 (accumulation stays f32 inside the kernel).

    NOTE: the pre-composition (and the mean-pool fold done in the wrapper)
    are exact only while every sub-module is linear."""
    wv, bv = params["wv"], params["bv"]
    wt, bt = params["wt"], params["bt"]
    wc, bc = params["wc"], params["bc"]
    PD, Dv = wv.shape
    Dq, Dt = wt.shape
    C = wc.shape[1]

    # classifier split removes the concat:  cat(t, i) @ Wc == t@Wc[:Dt] + i@Wc[Dt:]
    wc_t, wc_v = wc[:Dt], wc[Dt:]
    A = wv @ wc_v                        # [PD, C]  visual path, pre-composed
    Bq = wt @ wc_t                       # [Dq, C]  text path, pre-composed
    c = bv @ wc_v + bt @ wc_t + bc       # [1, C]   all biases folded

    PDp, Dqp, Cp = (_round_up(d, LANE) for d in (PD, Dq, C))
    return {
        "patch": params["patch"],
        "dims": (PD, Dq, C),
        "pdims": (PDp, Dqp, Cp),
        "A": _pad_dim(_pad_dim(A, 0, PDp), 1, Cp).astype(jnp.bfloat16),
        "Bq": _pad_dim(_pad_dim(Bq, 0, Dqp), 1, Cp).astype(jnp.bfloat16),
        "c": _pad_dim(c, 1, Cp).astype(jnp.float32),
    }


# -------------------- wrapper ------------------------------------------------
def vqa_forward(image, question, prepped):
    """image: [B, C, H, W] (NCHW), question: [B, Dq] float features."""
    B, Cin, H, W = image.shape
    P = prepped["patch"]
    PD, Dq, C = prepped["dims"]
    PDp, Dqp, Cp = prepped["pdims"]
    NP = (H // P) * (W // P)

    # Wrapper-side layout plumbing: patchify NCHW -> [B, NP, PD] and mean-pool
    # over patches BEFORE the kernel (exact: the patch embed is linear).
    # The kernel never sees the [B, NP, PD] tensor.
    patches = image.reshape(B, Cin, H // P, P, W // P, P)
    patches = patches.transpose(0, 2, 4, 1, 3, 5).reshape(B, NP, PD)
    pooled = jnp.mean(patches, axis=1)                                # [B, PD] f32

    # Pad lanes to 128 and the batch/sublane dim to a multiple of TB, cast to bf16.
    Bp = _round_up(B, TB)
    pooled = _pad_dim(_pad_dim(pooled, 1, PDp), 0, Bp).astype(jnp.bfloat16)
    q = _pad_dim(_pad_dim(question, 1, Dqp), 0, Bp).astype(jnp.bfloat16)

    grid = (Bp // TB,)
    flops = 2 * Bp * Cp * (PDp + Dqp)
    bytes_accessed = (pooled.size * 2 + q.size * 2
                      + prepped["A"].size * 2 + prepped["Bq"].size * 2
                      + prepped["c"].size * 4 + Bp * Cp * 4)

    out_padded = pl.pallas_call(
        vqa_kernel,
        out_shape=jax.ShapeDtypeStruct((Bp, Cp), jnp.float32),
        grid=grid,
        in_specs=[
            pl.BlockSpec((TB, PDp), lambda i: (i, 0)),   # pooled: tiled over batch
            pl.BlockSpec((TB, Dqp), lambda i: (i, 0)),   # question: tiled over batch
            pl.BlockSpec((PDp, Cp), lambda i: (0, 0)),   # A: resident
            pl.BlockSpec((Dqp, Cp), lambda i: (0, 0)),   # Bq: resident
            pl.BlockSpec((1, Cp), lambda i: (0, 0)),     # c: resident
        ],
        out_specs=pl.BlockSpec((TB, Cp), lambda i: (i, 0)),
        compiler_params=pltpu.CompilerParams(
            dimension_semantics=("parallel",),            # shards across v7x's 2 TCs
            vmem_limit_bytes=16 * 1024 * 1024,            # fits v5e/v6e/v7x scoped VMEM
        ),
        cost_estimate=pl.CostEstimate(flops=flops, transcendentals=0,
                                      bytes_accessed=bytes_accessed),
    )(pooled, q, prepped["A"], prepped["Bq"], prepped["c"])

    # strip sublane + lane padding (kernel stores are fully dense [TB, 128])
    return out_padded[:B, :C]


# -------------------- pure-JAX reference for sanity check -------------------
def vqa_reference(image, question, params):
    B, C, H, W = image.shape
    P = params["patch"]
    patches = image.reshape(B, C, H // P, P, W // P, P)
    patches = patches.transpose(0, 2, 4, 1, 3, 5).reshape(
        B, (H // P) * (W // P), C * P * P)
    img_out = jnp.mean(patches @ params["wv"] + params["bv"], axis=1)
    text_out = question @ params["wt"] + params["bt"]
    x = jnp.concatenate([text_out, img_out], axis=1)
    return x @ params["wc"] + params["bc"]


# -------------------- main ---------------------------------------------------
if __name__ == "__main__":
    # small shapes consistent with the forward
    B, Cin, H, W = 2, 4, 16, 16
    P = 4                      # patch size -> NP = 16, PD = C*P*P = 64
    Dv, Dt, Dq = 32, 32, 32
    NUM_CLASSES = 16
    PD = Cin * P * P

    key = jax.random.PRNGKey(0)
    k_img, k_q, k_wv, k_wt, k_wc = jax.random.split(key, 5)

    image = jax.random.normal(k_img, (B, Cin, H, W), dtype=jnp.float32)
    question = jax.random.normal(k_q, (B, Dq), dtype=jnp.float32)

    params = {
        "patch": P,
        "wv": 0.02 * jax.random.normal(k_wv, (PD, Dv), dtype=jnp.float32),
        "bv": jnp.zeros((1, Dv), dtype=jnp.float32),
        "wt": 0.02 * jax.random.normal(k_wt, (Dq, Dt), dtype=jnp.float32),
        "bt": jnp.zeros((1, Dt), dtype=jnp.float32),
        "wc": 0.02 * jax.random.normal(k_wc, (Dt + Dv, NUM_CLASSES),
                                       dtype=jnp.float32),
        "bc": jnp.zeros((1, NUM_CLASSES), dtype=jnp.float32),
    }

    prepped = prepare_params(params)
    out = vqa_forward(image, question, prepped)
    out = jax.block_until_ready(out)

    ref = vqa_reference(image, question, params)
    assert out.shape == (B, NUM_CLASSES)
    # bf16 matmul operands / pre-composed bf16 weights with f32 accumulation
    # vs. a pure-f32 reference -> compare at bf16 tolerance.
    err = float(jnp.max(jnp.abs(out - ref)))
    assert jnp.allclose(out, ref, atol=2e-3, rtol=2e-2), err

    print("KERNEL_OK")
</pallas_src>

<mosaic_0001>
module attributes {stable_mosaic.version = 11 : i64} {
  func.func @vqa_kernel(%arg0: i32, %arg1: memref<16x128xbf16, #tpu.memory_space<vmem>>, %arg2: memref<16x128xbf16, #tpu.memory_space<vmem>>, %arg3: memref<128x128xbf16, #tpu.memory_space<vmem>>, %arg4: memref<128x128xbf16, #tpu.memory_space<vmem>>, %arg5: memref<1x128xf32, #tpu.memory_space<vmem>>, %arg6: memref<16x128xf32, #tpu.memory_space<vmem>>) attributes {dimension_semantics = [#tpu.dimension_semantics<parallel>], iteration_bounds = array<i64: 1>, scalar_prefetch = 0 : i64, scratch_operands = 0 : i64, tpu.core_type = #tpu.core_type<tc>, window_params = [{transform_indices = @transform_0, window_bounds = array<i64: 16, 128>}, {transform_indices = @transform_1, window_bounds = array<i64: 16, 128>}, {pipeline_mode = #tpu.pipeline_mode<synchronous>, transform_indices = @transform_2, window_bounds = array<i64: 128, 128>}, {pipeline_mode = #tpu.pipeline_mode<synchronous>, transform_indices = @transform_3, window_bounds = array<i64: 128, 128>}, {pipeline_mode = #tpu.pipeline_mode<synchronous>, transform_indices = @transform_4, window_bounds = array<i64: 1, 128>}, {transform_indices = @transform_5, window_bounds = array<i64: 16, 128>}]} {
    %c0 = arith.constant 0 : index
    %c0_0 = arith.constant 0 : index
    %0 = vector.load %arg1[%c0, %c0_0] : memref<16x128xbf16, #tpu.memory_space<vmem>>, vector<16x128xbf16>
    %c0_1 = arith.constant 0 : index
    %c0_2 = arith.constant 0 : index
    %1 = vector.load %arg3[%c0_1, %c0_2] : memref<128x128xbf16, #tpu.memory_space<vmem>>, vector<128x128xbf16>
    %cst = arith.constant dense<0.000000e+00> : vector<16x128xf32>
    %2 = tpu.matmul %0, %1, %cst {dimension_numbers = #tpu.dot_dimension_numbers<[1], [0], [0], [1], [0, 0, 1, 1], [], []>} : vector<16x128xbf16>, vector<128x128xbf16>, vector<16x128xf32> -> vector<16x128xf32>
    %c0_3 = arith.constant 0 : index
    %c0_4 = arith.constant 0 : index
    %3 = vector.load %arg2[%c0_3, %c0_4] : memref<16x128xbf16, #tpu.memory_space<vmem>>, vector<16x128xbf16>
    %c0_5 = arith.constant 0 : index
    %c0_6 = arith.constant 0 : index
    %4 = vector.load %arg4[%c0_5, %c0_6] : memref<128x128xbf16, #tpu.memory_space<vmem>>, vector<128x128xbf16>
    %cst_7 = arith.constant dense<0.000000e+00> : vector<16x128xf32>
    %5 = tpu.matmul %3, %4, %cst_7 {dimension_numbers = #tpu.dot_dimension_numbers<[1], [0], [0], [1], [0, 0, 1, 1], [], []>} : vector<16x128xbf16>, vector<128x128xbf16>, vector<16x128xf32> -> vector<16x128xf32>
    %6 = arith.addf %2, %5 : vector<16x128xf32>
    %c0_8 = arith.constant 0 : index
    %c0_9 = arith.constant 0 : index
    %7 = vector.load %arg5[%c0_8, %c0_9] : memref<1x128xf32, #tpu.memory_space<vmem>>, vector<1x128xf32>
    %8 = vector.broadcast %7 : vector<1x128xf32> to vector<16x128xf32>
    %9 = arith.addf %6, %8 : vector<16x128xf32>
    %c0_10 = arith.constant 0 : index
    %c0_11 = arith.constant 0 : index
    %10 = vector.load %arg6[%c0_10, %c0_11] : memref<16x128xf32, #tpu.memory_space<vmem>>, vector<16x128xf32>
    tpu.vector_store %arg6[%c0_10, %c0_11], %9 {strides = array<i32>} : memref<16x128xf32, #tpu.memory_space<vmem>>, vector<16x128xf32>,
    return
  }
  func.func @transform_0(%arg0: i32) -> (i32, i32) {
    %c0_i32 = arith.constant 0 : i32
    %c0_i32_0 = arith.constant 0 : i32
    return %arg0, %c0_i32 : i32, i32
  }
  func.func @transform_1(%arg0: i32) -> (i32, i32) {
    %c0_i32 = arith.constant 0 : i32
    %c0_i32_0 = arith.constant 0 : i32
    return %arg0, %c0_i32 : i32, i32
  }
  func.func @transform_2(%arg0: i32) -> (i32, i32) {
    %c0_i32 = arith.constant 0 : i32
    %c0_i32_0 = arith.constant 0 : i32
    %c0_i32_1 = arith.constant 0 : i32
    return %c0_i32, %c0_i32_0 : i32, i32
  }
  func.func @transform_3(%arg0: i32) -> (i32, i32) {
    %c0_i32 = arith.constant 0 : i32
    %c0_i32_0 = arith.constant 0 : i32
    %c0_i32_1 = arith.constant 0 : i32
    return %c0_i32, %c0_i32_0 : i32, i32
  }
  func.func @transform_4(%arg0: i32) -> (i32, i32) {
    %c0_i32 = arith.constant 0 : i32
    %c0_i32_0 = arith.constant 0 : i32
    %c0_i32_1 = arith.constant 0 : i32
    return %c0_i32, %c0_i32_0 : i32, i32
  }
  func.func @transform_5(%arg0: i32) -> (i32, i32) {
    %c0_i32 = arith.constant 0 : i32
    %c0_i32_0 = arith.constant 0 : i32
    return %arg0, %c0_i32 : i32, i32
  }
}

</mosaic_0001>

<llo_original>
// kernel: tpu_custom_call.1
$region0: #{tpu_custom_call.1}
  #allocation0 [shape = 'u32[]', space=smem, size = 0x4, offset = 0x4, fixed_abs, tag = 'smem constant byte address 0x4 - core index']
  #allocation1 [shape = 'u32[72,128]{1,0:T(1,128)}', space=vmem, size = 0x9000, scoped, tag = 'internal scratch']
  %s0 = inlined_call_operand.hbm [shape: bf16[16,128], index: 0, kind: input, shape index: {}]
  %s1 = inlined_call_operand.hbm [shape: bf16[16,128], index: 1, kind: input, shape index: {}]
  %s2 = inlined_call_operand.hbm [shape: bf16[128,128], index: 2, kind: input, shape index: {}]
  %s3 = inlined_call_operand.hbm [shape: bf16[128,128], index: 3, kind: input, shape index: {}]
  %s4 = inlined_call_operand.vmem [shape: f32[1,128], index: 4, kind: input, shape index: {}]
  %s5 = inlined_call_operand.hbm [shape: f32[16,128], index: 5, kind: output, shape index: {}]
  %s6 = sld [smem:[#allocation0]]
  $region46: #{tpu_custom_call.1} parent=0
    _
  %s8 = ssub.s32 1, %s6
  %s9 = scalar_select 0, %s8, %s6
  $region1: #{tpu_custom_call.1} parent=0
    #allocation2 [shape = 'u8[4096]{0}', space=vmem, size = 0x1000, scoped, tag = 'input window, operand 0, single buffered']
    #allocation3 [shape = 's32[1]{0}', space=sflag, size = 0x4, scoped, tag = 'scoped memory for tpu_custom_call.1']
    #allocation4 [shape = 's32[1]{0}', space=sflag, size = 0x4, scoped, tag = 'scoped memory for tpu_custom_call.1']
    #allocation5 [shape = 'u8[4096]{0}', space=vmem, size = 0x1000, scoped, tag = 'input window, operand 1, single buffered']
    #allocation6 [shape = 's32[1]{0}', space=sflag, size = 0x4, scoped, tag = 'scoped memory for tpu_custom_call.1']
    #allocation7 [shape = 'u8[32768]{0}', space=vmem, size = 0x8000, scoped, tag = 'input window, operand 2, single buffered']
    #allocation8 [shape = 'u8[32768]{0}', space=vmem, size = 0x8000, scoped, tag = 'input window, operand 3, single buffered']
    #allocation9 [shape = 's32[1]{0}', space=sflag, size = 0x4, scoped, tag = 'scoped memory for tpu_custom_call.1']
    #allocation10 [shape = 'u8[8192]{0}', space=vmem, size = 0x2000, scoped, tag = 'output window, operand 0, single buffered']
    %10 = vsyncpa [#allocation3], 0
    %11 = vsyncpa [#allocation6], 0
    %12 = vsyncpa [#allocation9], 0
    %13 = vsyncpa [#allocation4], 0
    // Predicated region
    $region2: #{tpu_custom_call.1} parent=1 // pred_check
      _
    $region3: #{tpu_custom_call.1} parent=1 // pred_check_branch
      %15 = sbr.rel (0) target = $region5
    $region4: #{tpu_custom_call.1} parent=1 // pred_region
      %17 = vsyncadd [#allocation3], 0
      %s18 = sshll.u32 %s0, 4
      %s19 = int_to_ptr.hbm [resolvable:$true] %s18
      %s20 = sshll.u32 [#allocation2], 4
      %s21 = int_to_ptr.vmem [resolvable:$true] %s20
      %26 = dma.hbm_to_vmem [thread:$0]  %s19, 128, %s21, [#allocation3], 64, 64, 4
    $region5: #{tpu_custom_call.1} parent=1 // pred_fallthru
      _
    // Predicated region
    $region6: #{tpu_custom_call.1} parent=1 // pred_check
      _
    $region7: #{tpu_custom_call.1} parent=1 // pred_check_branch
      %28 = sbr.rel (0) target = $region9
    $region8: #{tpu_custom_call.1} parent=1 // pred_region
      %30 = vsyncadd [#allocation6], 0
      %s31 = sshll.u32 %s1, 4
      %s32 = int_to_ptr.hbm [resolvable:$true] %s31
      %s33 = sshll.u32 [#allocation5], 4
      %s34 = int_to_ptr.vmem [resolvable:$true] %s33
      %39 = dma.hbm_to_vmem [thread:$0]  %s32, 128, %s34, [#allocation6], 64, 64, 4
    $region9: #{tpu_custom_call.1} parent=1 // pred_fallthru
      _
    // Predicated region
    $region10: #{tpu_custom_call.1} parent=1 // pred_check
      _
    $region11: #{tpu_custom_call.1} parent=1 // pred_check_branch
      %41 = sbr.rel (0) target = $region13
    $region12: #{tpu_custom_call.1} parent=1 // pred_region
      %43 = vsyncadd [#allocation6], 0
      %s44 = sshll.u32 %s2, 4
      %s45 = int_to_ptr.hbm [resolvable:$true] %s44
      %s46 = sshll.u32 [#allocation7], 4
      %s47 = int_to_ptr.vmem [resolvable:$true] %s46
      %52 = dma.hbm_to_vmem [thread:$0]  %s45, 1024, %s47, [#allocation6], 64, 64, 4
    $region13: #{tpu_custom_call.1} parent=1 // pred_fallthru
      _
    // Predicated region
    $region14: #{tpu_custom_call.1} parent=1 // pred_check
      _
    $region15: #{tpu_custom_call.1} parent=1 // pred_check_branch
      %54 = sbr.rel (0) target = $region17
    $region16: #{tpu_custom_call.1} parent=1 // pred_region
      %56 = vsyncadd [#allocation9], 0
      %s57 = sshll.u32 %s3, 4
      %s58 = int_to_ptr.hbm [resolvable:$true] %s57
      %s59 = sshll.u32 [#allocation8], 4
      %s60 = int_to_ptr.vmem [resolvable:$true] %s59
      %65 = dma.hbm_to_vmem [thread:$0]  %s58, 1024, %s60, [#allocation9], 64, 64, 4
    $region17: #{tpu_custom_call.1} parent=1 // pred_fallthru
      _
    // Predicated region
    $region18: #{tpu_custom_call.1} parent=1 // pred_check
      _
    $region19: #{tpu_custom_call.1} parent=1 // pred_check_branch
      %67 = sbr.rel (0) target = $region21
    $region20: #{tpu_custom_call.1} parent=1 // pred_region
      _
    $region21: #{tpu_custom_call.1} parent=1 // pred_fallthru
      _
    // Predicated region
    $region22: #{tpu_custom_call.1} parent=1 // pred_check
      _
    $region23: #{tpu_custom_call.1} parent=1 // pred_check_branch
      %69 = sbr.rel (0) target = $region25
    $region24: #{tpu_custom_call.1} parent=1 // pred_region
      %71 = dma.done [#allocation3], 128
    $region25: #{tpu_custom_call.1} parent=1 // pred_fallthru
      _
    // Predicated region
    $region26: #{tpu_custom_call.1} parent=1 // pred_check
      _
    $region27: #{tpu_custom_call.1} parent=1 // pred_check_branch
      %73 = sbr.rel (0) target = $region29
    $region28: #{tpu_custom_call.1} parent=1 // pred_region
      %75 = dma.done [#allocation6], 128
    $region29: #{tpu_custom_call.1} parent=1 // pred_fallthru
      _
    // Predicated region
    $region30: #{tpu_custom_call.1} parent=1 // pred_check
      _
    $region31: #{tpu_custom_call.1} parent=1 // pred_check_branch
      %77 = sbr.rel (0) target = $region33
    $region32: #{tpu_custom_call.1} parent=1 // pred_region
      %79 = dma.done [#allocation6], 1024
    $region33: #{tpu_custom_call.1} parent=1 // pred_fallthru
      _
    // Predicated region
    $region34: #{tpu_custom_call.1} parent=1 // pred_check
      _
    $region35: #{tpu_custom_call.1} parent=1 // pred_check_branch
      %81 = sbr.rel (0) target = $region37
    $region36: #{tpu_custom_call.1} parent=1 // pred_region
      %83 = dma.done [#allocation9], 1024
    $region37: #{tpu_custom_call.1} parent=1 // pred_fallthru
      _
    %v84 = vld [vmem:[#allocation2] sm:$0xf]
    %v85 = vld [vmem:[#allocation2 + $0x4] sm:$0xf]
    %v86 = vld [vmem:[#allocation7] sm:$0xf]
    %v87 = vld [vmem:[#allocation7 + $0x4] sm:$0xf]
    %v88 = vld [vmem:[#allocation7 + $0x8] sm:$0xf]
    %v89 = vld [vmem:[#allocation7 + $0xc] sm:$0xf]
    %v90 = vld [vmem:[#allocation7 + $0x10] sm:$0xf]
    %v91 = vld [vmem:[#allocation7 + $0x14] sm:$0xf]
    %v92 = vld [vmem:[#allocation7 + $0x18] sm:$0xf]
    %v93 = vld [vmem:[#allocation7 + $0x1c] sm:$0xf]
    %v94 = vld [vmem:[#allocation7 + $0x20] sm:$0xf]
    %v95 = vld [vmem:[#allocation7 + $0x24] sm:$0xf]
    %v96 = vld [vmem:[#allocation7 + $0x28] sm:$0xf]
    %v97 = vld [vmem:[#allocation7 + $0x2c] sm:$0xf]
    %v98 = vld [vmem:[#allocation7 + $0x30] sm:$0xf]
    %v99 = vld [vmem:[#allocation7 + $0x34] sm:$0xf]
    %v100 = vld [vmem:[#allocation7 + $0x38] sm:$0xf]
    %v101 = vld [vmem:[#allocation7 + $0x3c] sm:$0xf]
    %v102 = vld [vmem:[#allocation5] sm:$0xf]
    %v103 = vld [vmem:[#allocation5 + $0x4] sm:$0xf]
    %v104 = vld [vmem:[#allocation8] sm:$0xf]
    %v105 = vld [vmem:[#allocation8 + $0x4] sm:$0xf]
    %v106 = vld [vmem:[#allocation8 + $0x8] sm:$0xf]
    %v107 = vld [vmem:[#allocation8 + $0xc] sm:$0xf]
    %v108 = vld [vmem:[#allocation8 + $0x10] sm:$0xf]
    %v109 = vld [vmem:[#allocation8 + $0x14] sm:$0xf]
    %v110 = vld [vmem:[#allocation8 + $0x18] sm:$0xf]
    %v111 = vld [vmem:[#allocation8 + $0x1c] sm:$0xf]
    %v112 = vld [vmem:[#allocation8 + $0x20] sm:$0xf]
    %v113 = vld [vmem:[#allocation8 + $0x24] sm:$0xf]
    %v114 = vld [vmem:[#allocation8 + $0x28] sm:$0xf]
    %v115 = vld [vmem:[#allocation8 + $0x2c] sm:$0xf]
    %v116 = vld [vmem:[#allocation8 + $0x30] sm:$0xf]
    %v117 = vld [vmem:[#allocation8 + $0x34] sm:$0xf]
    %v118 = vld [vmem:[#allocation8 + $0x38] sm:$0xf]
    %v119 = vld [vmem:[#allocation8 + $0x3c] sm:$0xf]
    %v122 = vunpack.c.l.b16 %v102
    %v123 = vunpack.c.l.b16 %v103
    %v124 = vpack.c.b16 %v123, %v122
    %v142 = vunpack.c.l.b16 %v104
    %v143 = vunpack.c.l.b16 %v105
    %v144 = vunpack.c.l.b16 %v106
    %v145 = vunpack.c.l.b16 %v107
    %v146 = vunpack.c.l.b16 %v108
    %v147 = vunpack.c.l.b16 %v109
    %v148 = vunpack.c.l.b16 %v110
    %v149 = vunpack.c.l.b16 %v111
    %v150 = vunpack.c.l.b16 %v112
    %v151 = vunpack.c.l.b16 %v113
    %v152 = vunpack.c.l.b16 %v114
    %v153 = vunpack.c.l.b16 %v115
    %v154 = vunpack.c.l.b16 %v116
    %v155 = vunpack.c.l.b16 %v117
    %v156 = vunpack.c.l.b16 %v118
    %v157 = vunpack.c.l.b16 %v119
    %v158 = vpack.c.b16 %v143, %v142
    %v159 = vpack.c.b16 %v145, %v144
    %v160 = vpack.c.b16 %v147, %v146
    %v161 = vpack.c.b16 %v149, %v148
    %v162 = vpack.c.b16 %v151, %v150
    %v163 = vpack.c.b16 %v153, %v152
    %v164 = vpack.c.b16 %v155, %v154
    %v165 = vpack.c.b16 %v157, %v156
    %174 = vmatpush.bf16.msra.mxu0 %v165
    %175 = vmatpush.bf16.msra.mxu0 %v164
    %176 = vmatpush.bf16.msra.mxu0 %v163
    %177 = vmatpush.bf16.msra.mxu0 %v162
    %178 = vmatpush.bf16.msra.mxu0 %v161
    %179 = vmatpush.bf16.msra.mxu0 %v160
    %180 = vmatpush.bf16.msra.mxu0 %v159
    %181 = vmatpush.bf16.msra.mxu0 %v158
    %182 = vmatmul.bf16.gmra.mxu0 %v124
    %v183 = vpop.f32.mrf.mxu0
    %v184 = vadd.f32 0.0, %v183
    %v185 = vpop.f32.mrf.mxu0
    %v186 = vadd.f32 0.0, %v185
    %187 = vdwg.mxu0
    %v190 = vunpack.c.l.b16 %v84
    %v191 = vunpack.c.l.b16 %v85
    %v192 = vpack.c.b16 %v191, %v190
    %v210 = vunpack.c.l.b16 %v86
    %v211 = vunpack.c.l.b16 %v87
    %v212 = vunpack.c.l.b16 %v88
    %v213 = vunpack.c.l.b16 %v89
    %v214 = vunpack.c.l.b16 %v90
    %v215 = vunpack.c.l.b16 %v91
    %v216 = vunpack.c.l.b16 %v92
    %v217 = vunpack.c.l.b16 %v93
    %v218 = vunpack.c.l.b16 %v94
    %v219 = vunpack.c.l.b16 %v95
    %v220 = vunpack.c.l.b16 %v96
    %v221 = vunpack.c.l.b16 %v97
    %v222 = vunpack.c.l.b16 %v98
    %v223 = vunpack.c.l.b16 %v99
    %v224 = vunpack.c.l.b16 %v100
    %v225 = vunpack.c.l.b16 %v101
    %v226 = vpack.c.b16 %v211, %v210
    %v227 = vpack.c.b16 %v213, %v212
    %v228 = vpack.c.b16 %v215, %v214
    %v229 = vpack.c.b16 %v217, %v216
    %v230 = vpack.c.b16 %v219, %v218
    %v231 = vpack.c.b16 %v221, %v220
    %v232 = vpack.c.b16 %v223, %v222
    %v233 = vpack.c.b16 %v225, %v224
    %242 = vmatpush.bf16.msra.mxu0 %v233
    %243 = vmatpush.bf16.msra.mxu0 %v232
    %244 = vmatpush.bf16.msra.mxu0 %v231
    %245 = vmatpush.bf16.msra.mxu0 %v230
    %246 = vmatpush.bf16.msra.mxu0 %v229
    %247 = vmatpush.bf16.msra.mxu0 %v228
    %248 = vmatpush.bf16.msra.mxu0 %v227
    %249 = vmatpush.bf16.msra.mxu0 %v226
    %250 = vmatmul.bf16.gmra.mxu0 %v192
    %v251 = vpop.f32.mrf.mxu0
    %v252 = vadd.f32 %v184, %v251
    %v253 = vpop.f32.mrf.mxu0
    %v254 = vadd.f32 %v186, %v253
    %255 = vdwg.mxu0
    %v256 = vld [vmem:[%s4] sm:$0x1]
    %v258 = vperm.slane %v256, 0
    %v260 = vadd.f32 %v252, %v258
    %v261 = vadd.f32 %v254, %v258
    %262 = vst [vmem:[#allocation10] sm:$0xff] %v260
    %263 = vst [vmem:[#allocation10 + $0x8] sm:$0xff] %v261
    // Predicated region
    $region38: #{tpu_custom_call.1} parent=1 // pred_check
      _
    $region39: #{tpu_custom_call.1} parent=1 // pred_check_branch
      %265 = sbr.rel (0) target = $region41
    $region40: #{tpu_custom_call.1} parent=1 // pred_region
      %267 = vsyncadd [#allocation4], 0
      %s268 = sshll.u32 [#allocation10], 4
      %s269 = int_to_ptr.vmem [resolvable:$true] %s268
      %s270 = sshll.u32 %s5, 4
      %s271 = int_to_ptr.hbm [resolvable:$true] %s270
      %276 = dma.vmem_to_hbm [thread:$0]  %s269, 256, %s271, [#allocation4], 128, 128, 8
    $region41: #{tpu_custom_call.1} parent=1 // pred_fallthru
      _
    // Predicated region
    $region42: #{tpu_custom_call.1} parent=1 // pred_check
      _
    $region43: #{tpu_custom_call.1} parent=1 // pred_check_branch
      %278 = sbr.rel (0) target = $region45
    $region44: #{tpu_custom_call.1} parent=1 // pred_region
      %280 = dma.done [#allocation4], 256
    $region45: #{tpu_custom_call.1} parent=1 // pred_fallthru
      _
    %281 = vsyncpa [#allocation3], 1
    %282 = vsyncpa [#allocation6], 1
    %283 = vsyncpa [#allocation9], 1
    %284 = vsyncpa [#allocation4], 1

</llo_original>
